<compile_context>
chip_gen: v5e
topology: v5e:2x2
jax: 0.10.0
libtpu: 0.0.40
codegen_flags: <defaults>
</compile_context>

<pallas_src>
import math

import jax
import jax.numpy as jnp
from jax.experimental import pallas as pl
from jax.experimental.pallas import tpu as pltpu


def _round_up(x, m):
    return (x + m - 1) // m * m


def _pick_block(total, preferred, unit):
    """Largest multiple of `unit` <= min(preferred, total) that divides `total`.

    `total` is already a multiple of `unit`, so this terminates at `unit` and never
    creates extra fully-padded (fully-masked) trailing blocks.
    """
    b = min(preferred, total)
    b = max(unit, (b // unit) * unit)
    while total % b:
        b -= unit
    return b


def _prefers_bf16_features():
    """bf16 VPU/EUP exist on v6e/v7x; on v5e and older bf16 would only add cast cost."""
    try:
        kind = jax.devices()[0].device_kind.lower()
    except Exception:
        return False
    return ("v6" in kind) or ("v7" in kind)


def _pad(x, tgt):
    return jnp.pad(x, [(0, t - s) for s, t in zip(x.shape, tgt)])


def additive_attention(queries, keys, values, valid_lens, wq, wk, wv, *,
                       q_block=128, k_block=None, feats_bf16=None):
    """Masked additive attention forward pass (eval mode: dropout is identity)."""
    B, Q, Dq = queries.shape
    _, K, Dk = keys.shape
    Dv = values.shape[-1]
    H = wq.shape[-1]

    newer_gen = _prefers_bf16_features()
    if feats_bf16 is None:
        feats_bf16 = newer_gen
    if k_block is None:
        # v6e/v7x: 256-wide MXU and fewer grid steps favour bigger key blocks.
        k_block = 256 if newer_gen else 128
    feat_dtype = jnp.bfloat16 if feats_bf16 else jnp.float32
    f32 = jnp.float32

    # ---- padding / tiling (pure layout plumbing; padded entries are zero) ------------
    Qp = _round_up(Q, 8)           # query rows (sublanes)
    Kp = _round_up(K, 128)         # key columns (lanes)
    Qt = _pick_block(Qp, q_block, 8)
    Kb = _pick_block(Kp, k_block, 128)
    Dqp = _round_up(Dq, 128)       # q-projection contraction dim (lanes of q block)
    Dkp = _round_up(Dk, 8)         # k-projection contraction dim (sublanes of keys^T)
    Dvp = _round_up(Dv, 128)       # value feature dim (lanes)
    Hs = _round_up(H, 8)           # hidden-dim storage (sublanes of W_k^T / k_projT)

    q_p = _pad(queries.astype(f32), (B, Qp, Dqp))
    kT_p = _pad(jnp.swapaxes(keys.astype(f32), 1, 2), (B, Dkp, Kp))   # keys^T per batch
    v_p = _pad(values.astype(f32), (B, Kp, Dvp))
    wq_p = _pad(wq.astype(f32), (Dqp, Hs))
    wkT_p = _pad(wk.astype(f32).T, (Hs, Dkp))                          # W_k^T
    wv_p = _pad(wv.astype(f32), (1, Hs))

    grid = (B, Qp // Qt, Kp // Kb)

    def kernel(vl_ref,                                         # SMEM (B,) int32 (prefetch)
               q_ref, kT_ref, v_ref, wq_ref, wkT_ref, wv_ref,  # VMEM inputs
               out_ref,                                        # VMEM (1, Qt, Dvp)
               qproj_ref, m_ref, l_ref, acc_ref):              # VMEM scratch
        b = pl.program_id(0)
        kb = pl.program_id(2)
        nkb = pl.num_programs(2)

        @pl.when(kb == 0)
        def _():
            # Per-(batch, q-tile) init: project this query tile once (MXU), reset
            # the online-softmax state.
            qproj_ref[...] = jnp.dot(q_ref[0], wq_ref[...],
                                     preferred_element_type=jnp.float32)   # (Qt, Hs)
            m_ref[...] = jnp.full_like(m_ref, -1e30)
            l_ref[...] = jnp.zeros_like(l_ref)
            acc_ref[...] = jnp.zeros_like(acc_ref)

        # Project this key block with K on lanes: (Hs, Dkp) @ (Dkp, Kb) -> (Hs, Kb).
        k_projT = jnp.dot(wkT_ref[...], kT_ref[0],
                          preferred_element_type=jnp.float32).astype(feat_dtype)
        q_proj = qproj_ref[...].astype(feat_dtype)                          # (Qt, Hs)
        wv_row = wv_ref[...]                                                # (1, Hs) f32

        # Additive scores: static loop over the *real* hidden units, so the EUP-bound
        # tanh touches exactly Qt*Kb*H elements (H never lane-padded).  The w_v multiply
        # and accumulation stay on the VPU — free filler under the saturated EUP.
        scores = jnp.zeros((Qt, Kb), jnp.float32)
        for h in range(H):
            a = q_proj[:, h:h + 1]                    # (Qt, 1)  broadcast over lanes (keys)
            bkey = k_projT[h:h + 1, :]                # (1, Kb)  broadcast over sublanes
            scores = scores + wv_row[0:1, h:h + 1] * jnp.tanh(a + bkey).astype(jnp.float32)

        # Mask exactly like the module: global key column j is valid iff j < valid_lens[b]
        # (mask value -1e6).  Padded key columns (j >= K) get probability exactly 0 so
        # degenerate all-masked rows still average over the K real keys only.
        col = jax.lax.broadcasted_iota(jnp.int32, (Qt, Kb), 1) + kb * Kb
        valid = vl_ref[b]
        masked = jnp.where(col < valid, scores, jnp.float32(-1000000.0))

        # Online (flash-style) softmax across key blocks.
        m_prev = m_ref[...]
        m_new = jnp.maximum(m_prev, jnp.max(masked, axis=-1, keepdims=True))   # (Qt, 1)
        alpha = jnp.exp(m_prev - m_new)
        p = jnp.exp(masked - m_new)                                            # (Qt, Kb)
        p = jnp.where(col < K, p, 0.0)
        l_ref[...] = alpha * l_ref[...] + jnp.sum(p, axis=-1, keepdims=True)
        acc_ref[...] = alpha * acc_ref[...] + jnp.dot(
            p, v_ref[0], preferred_element_type=jnp.float32)                   # (Qt, Dvp)
        m_ref[...] = m_new

        # TODO(synk): nn.Dropout on the attention weights is identity in eval mode;
        # training-mode dropout is not implemented.

        @pl.when(kb == nkb - 1)
        def _():
            inv_l = pl.reciprocal(l_ref[...], approx=True)                     # (Qt, 1)
            out_ref[0] = (acc_ref[...] * inv_l).astype(out_ref.dtype)

    grid_spec = pltpu.PrefetchScalarGridSpec(
        num_scalar_prefetch=1,
        grid=grid,
        in_specs=[
            pl.BlockSpec((1, Qt, Dqp), lambda b, qi, kb, vl: (b, qi, 0)),
            pl.BlockSpec((1, Dkp, Kb), lambda b, qi, kb, vl: (b, 0, kb)),
            pl.BlockSpec((1, Kb, Dvp), lambda b, qi, kb, vl: (b, kb, 0)),
            pl.BlockSpec((Dqp, Hs), lambda b, qi, kb, vl: (0, 0)),
            pl.BlockSpec((Hs, Dkp), lambda b, qi, kb, vl: (0, 0)),
            pl.BlockSpec((1, Hs), lambda b, qi, kb, vl: (0, 0)),
        ],
        out_specs=pl.BlockSpec((1, Qt, Dvp), lambda b, qi, kb, vl: (b, qi, 0)),
        scratch_shapes=[
            pltpu.VMEM((Qt, Hs), f32),     # query projection (computed once at kb == 0)
            pltpu.VMEM((Qt, 1), f32),      # running max
            pltpu.VMEM((Qt, 1), f32),      # running sum
            pltpu.VMEM((Qt, Dvp), f32),    # running weights @ V accumulator
        ],
    )

    # VMEM budget derived from the actual footprint (double-buffered blocks + scratch)
    # instead of a blanket request — leaves headroom on v7x's 64 MiB VMEM.
    def nbytes(shape, dtype):
        return math.prod(shape) * jnp.dtype(dtype).itemsize

    block_bytes = (nbytes((1, Qt, Dqp), f32) + nbytes((1, Dkp, Kb), f32)
                   + nbytes((1, Kb, Dvp), f32) + nbytes((Dqp, Hs), f32)
                   + nbytes((Hs, Dkp), f32) + nbytes((1, Hs), f32)
                   + nbytes((1, Qt, Dvp), f32))
    scratch_bytes = (nbytes((Qt, Hs), f32) + 2 * nbytes((Qt, 1), f32)
                     + nbytes((Qt, Dvp), f32))
    vmem_limit = 2 * block_bytes + scratch_bytes + (8 << 20)   # + compiler headroom
    vmem_limit = int(min(max(vmem_limit, 16 << 20), 64 << 20))

    out_padded = pl.pallas_call(
        kernel,
        out_shape=jax.ShapeDtypeStruct((B, Qp, Dvp), f32),
        grid_spec=grid_spec,
        compiler_params=pltpu.CompilerParams(
            dimension_semantics=("parallel", "parallel", "arbitrary"),
            vmem_limit_bytes=vmem_limit,
        ),
    )(valid_lens.astype(jnp.int32), q_p, kT_p, v_p, wq_p, wkT_p, wv_p)

    # TODO(synk): only the module's 1-D valid_lens convention is implemented; the 2-D
    # per-query valid_lens path of masked_softmax is not supported.
    return out_padded[:, :Q, :Dv]


if __name__ == "__main__":
    key = jax.random.PRNGKey(0)
    B, Q, K = 2, 2, 10
    query_size, key_size, num_hiddens, Dv = 20, 2, 8, 4

    kq, kw1, kw2, kw3 = jax.random.split(key, 4)

    # d2l-style small example: keys all ones, values = arange, valid_lens = [2, 6].
    queries = jax.random.normal(kq, (B, Q, query_size), dtype=jnp.float32)
    keys = jnp.ones((B, K, key_size), dtype=jnp.float32)
    values = jnp.tile(jnp.arange(40, dtype=jnp.float32).reshape(1, 10, 4), (B, 1, 1))
    valid_lens = jnp.array([2, 6], dtype=jnp.int32)

    # Deterministic nn.Linear-style init: U(-1/sqrt(fan_in), 1/sqrt(fan_in)), bias=False.
    def linear_init(k, fan_in, fan_out):
        bound = 1.0 / float(fan_in) ** 0.5
        return jax.random.uniform(k, (fan_in, fan_out), jnp.float32, -bound, bound)

    wq = linear_init(kw1, query_size, num_hiddens)        # (Dq, H)
    wk = linear_init(kw2, key_size, num_hiddens)          # (Dk, H)
    wv = linear_init(kw3, num_hiddens, 1).T               # stored as (1, H)

    feats_bf16 = _prefers_bf16_features()
    out = additive_attention(queries, keys, values, valid_lens, wq, wk, wv,
                             feats_bf16=feats_bf16)
    out = jax.block_until_ready(out)

    # Pure-JAX reference (same semantics as the PyTorch module for 1-D valid_lens, B == Q).
    qp = queries @ wq
    kp = keys @ wk
    feats = jnp.tanh(qp[:, :, None, :] + kp[:, None, :, :])
    scores = jnp.einsum("bqkh,h->bqk", feats, wv[0])
    mask = jnp.arange(K)[None, None, :] < valid_lens[:, None, None]
    weights = jax.nn.softmax(jnp.where(mask, scores, -1000000.0), axis=-1)
    ref = jnp.einsum("bqk,bkd->bqd", weights, values)

    tol = 5e-2 if feats_bf16 else 2e-2   # bf16 tanh path (v6e/v7x) is slightly looser
    assert jnp.allclose(out, ref, rtol=tol, atol=tol), "kernel/reference mismatch"
    print("KERNEL_OK")
</pallas_src>

<mosaic_0001>
module attributes {stable_mosaic.version = 11 : i64} {
  func.func @kernel(%arg0: i32, %arg1: i32, %arg2: i32, %arg3: memref<2xi32, #tpu.memory_space<smem>>, %arg4: memref<1x8x128xf32, #tpu.memory_space<vmem>>, %arg5: memref<1x8x128xf32, #tpu.memory_space<vmem>>, %arg6: memref<1x128x128xf32, #tpu.memory_space<vmem>>, %arg7: memref<128x8xf32, #tpu.memory_space<vmem>>, %arg8: memref<8x8xf32, #tpu.memory_space<vmem>>, %arg9: memref<1x8xf32, #tpu.memory_space<vmem>>, %arg10: memref<1x8x128xf32, #tpu.memory_space<vmem>>, %arg11: memref<8x8xf32, #tpu.memory_space<vmem>>, %arg12: memref<8x1xf32, #tpu.memory_space<vmem>>, %arg13: memref<8x1xf32, #tpu.memory_space<vmem>>, %arg14: memref<8x128xf32, #tpu.memory_space<vmem>>) attributes {dimension_semantics = [#tpu.dimension_semantics<parallel>, #tpu.dimension_semantics<parallel>, #tpu.dimension_semantics<arbitrary>], iteration_bounds = array<i64: 2, 1, 1>, scalar_prefetch = 1 : i64, scratch_operands = 4 : i64, tpu.core_type = #tpu.core_type<tc>, window_params = [{transform_indices = @transform_0, window_bounds = array<i64: 1, 8, 128>}, {transform_indices = @transform_1, window_bounds = array<i64: 1, 8, 128>}, {transform_indices = @transform_2, window_bounds = array<i64: 1, 128, 128>}, {pipeline_mode = #tpu.pipeline_mode<synchronous>, transform_indices = @transform_3, window_bounds = array<i64: 128, 8>}, {pipeline_mode = #tpu.pipeline_mode<synchronous>, transform_indices = @transform_4, window_bounds = array<i64: 8, 8>}, {pipeline_mode = #tpu.pipeline_mode<synchronous>, transform_indices = @transform_5, window_bounds = array<i64: 1, 8>}, {transform_indices = @transform_6, window_bounds = array<i64: 1, 8, 128>}]} {
    %c0_i32 = arith.constant 0 : i32
    %0 = arith.cmpi eq, %arg2, %c0_i32 : i32
    %1 = arith.extui %0 : i1 to i32
    %c0_i32_0 = arith.constant 0 : i32
    %2 = arith.cmpi ne, %1, %c0_i32_0 : i32
    scf.if %2 {
      %c0_32 = arith.constant 0 : index
      %c0_33 = arith.constant 0 : index
      %c0_34 = arith.constant 0 : index
      %131 = vector.load %arg4[%c0_32, %c0_33, %c0_34] : memref<1x8x128xf32, #tpu.memory_space<vmem>>, vector<1x8x128xf32>
      %132 = vector.shape_cast %131 : vector<1x8x128xf32> to vector<8x128xf32>
      %c0_35 = arith.constant 0 : index
      %c0_36 = arith.constant 0 : index
      %133 = vector.load %arg7[%c0_35, %c0_36] : memref<128x8xf32, #tpu.memory_space<vmem>>, vector<128x8xf32>
      %cst_37 = arith.constant dense<0.000000e+00> : vector<8x8xf32>
      %134 = tpu.matmul %132, %133, %cst_37 {dimension_numbers = #tpu.dot_dimension_numbers<[1], [0], [0], [1], [0, 0, 1, 1], [], []>} : vector<8x128xf32>, vector<128x8xf32>, vector<8x8xf32> -> vector<8x8xf32>
      %c0_38 = arith.constant 0 : index
      %c0_39 = arith.constant 0 : index
      %135 = vector.load %arg11[%c0_38, %c0_39] : memref<8x8xf32, #tpu.memory_space<vmem>>, vector<8x8xf32>
      tpu.vector_store %arg11[%c0_38, %c0_39], %134 {strides = array<i32>} : memref<8x8xf32, #tpu.memory_space<vmem>>, vector<8x8xf32>,
      %cst_40 = arith.constant -1.000000e+30 : f32
      %136 = vector.broadcast %cst_40 : f32 to vector<8x1xf32>
      %c0_41 = arith.constant 0 : index
      %c0_42 = arith.constant 0 : index
      %137 = vector.load %arg12[%c0_41, %c0_42] : memref<8x1xf32, #tpu.memory_space<vmem>>, vector<8x1xf32>
      tpu.vector_store %arg12[%c0_41, %c0_42], %136 {strides = array<i32>} : memref<8x1xf32, #tpu.memory_space<vmem>>, vector<8x1xf32>,
      %cst_43 = arith.constant 0.000000e+00 : f32
      %138 = vector.broadcast %cst_43 : f32 to vector<8x1xf32>
      %c0_44 = arith.constant 0 : index
      %c0_45 = arith.constant 0 : index
      %139 = vector.load %arg13[%c0_44, %c0_45] : memref<8x1xf32, #tpu.memory_space<vmem>>, vector<8x1xf32>
      tpu.vector_store %arg13[%c0_44, %c0_45], %138 {strides = array<i32>} : memref<8x1xf32, #tpu.memory_space<vmem>>, vector<8x1xf32>,
      %cst_46 = arith.constant 0.000000e+00 : f32
      %140 = vector.broadcast %cst_46 : f32 to vector<8x128xf32>
      %c0_47 = arith.constant 0 : index
      %c0_48 = arith.constant 0 : index
      %141 = vector.load %arg14[%c0_47, %c0_48] : memref<8x128xf32, #tpu.memory_space<vmem>>, vector<8x128xf32>
      tpu.vector_store %arg14[%c0_47, %c0_48], %140 {strides = array<i32>} : memref<8x128xf32, #tpu.memory_space<vmem>>, vector<8x128xf32>,
    } else {
    }
    %c0 = arith.constant 0 : index
    %c0_1 = arith.constant 0 : index
    %3 = vector.load %arg8[%c0, %c0_1] : memref<8x8xf32, #tpu.memory_space<vmem>>, vector<8x8xf32>
    %c0_2 = arith.constant 0 : index
    %c0_3 = arith.constant 0 : index
    %c0_4 = arith.constant 0 : index
    %4 = vector.load %arg5[%c0_2, %c0_3, %c0_4] : memref<1x8x128xf32, #tpu.memory_space<vmem>>, vector<1x8x128xf32>
    %5 = vector.shape_cast %4 : vector<1x8x128xf32> to vector<8x128xf32>
    %cst = arith.constant dense<0.000000e+00> : vector<8x128xf32>
    %6 = tpu.matmul %3, %5, %cst {dimension_numbers = #tpu.dot_dimension_numbers<[1], [0], [0], [1], [0, 0, 1, 1], [], []>} : vector<8x8xf32>, vector<8x128xf32>, vector<8x128xf32> -> vector<8x128xf32>
    %c0_5 = arith.constant 0 : index
    %c0_6 = arith.constant 0 : index
    %7 = vector.load %arg11[%c0_5, %c0_6] : memref<8x8xf32, #tpu.memory_space<vmem>>, vector<8x8xf32>
    %c0_7 = arith.constant 0 : index
    %c0_8 = arith.constant 0 : index
    %8 = vector.load %arg9[%c0_7, %c0_8] : memref<1x8xf32, #tpu.memory_space<vmem>>, vector<1x8xf32>
    %cst_9 = arith.constant 0.000000e+00 : f32
    %9 = vector.broadcast %cst_9 : f32 to vector<8x128xf32>
    %10 = vector.extract_strided_slice %7 {offsets = [0, 0], sizes = [8, 1], strides = [1, 1]} : vector<8x8xf32> to vector<8x1xf32>
    %11 = vector.extract_strided_slice %6 {offsets = [0, 0], sizes = [1, 128], strides = [1, 1]} : vector<8x128xf32> to vector<1x128xf32>
    %12 = vector.extract_strided_slice %8 {offsets = [0, 0], sizes = [1, 1], strides = [1, 1]} : vector<1x8xf32> to vector<1x1xf32>
    %13 = vector.broadcast %10 : vector<8x1xf32> to vector<8x128xf32>
    %14 = vector.broadcast %11 : vector<1x128xf32> to vector<8x128xf32>
    %15 = arith.addf %13, %14 : vector<8x128xf32>
    %16 = math.tanh %15 : vector<8x128xf32>
    %17 = vector.broadcast %12 : vector<1x1xf32> to vector<8x128xf32>
    %18 = arith.mulf %17, %16 : vector<8x128xf32>
    %19 = arith.addf %9, %18 : vector<8x128xf32>
    %20 = vector.extract_strided_slice %7 {offsets = [0, 1], sizes = [8, 1], strides = [1, 1]} : vector<8x8xf32> to vector<8x1xf32>
    %21 = vector.extract_strided_slice %6 {offsets = [1, 0], sizes = [1, 128], strides = [1, 1]} : vector<8x128xf32> to vector<1x128xf32>
    %22 = vector.extract_strided_slice %8 {offsets = [0, 1], sizes = [1, 1], strides = [1, 1]} : vector<1x8xf32> to vector<1x1xf32>
    %23 = vector.broadcast %20 : vector<8x1xf32> to vector<8x128xf32>
    %24 = vector.broadcast %21 : vector<1x128xf32> to vector<8x128xf32>
    %25 = arith.addf %23, %24 : vector<8x128xf32>
    %26 = math.tanh %25 : vector<8x128xf32>
    %27 = vector.broadcast %22 : vector<1x1xf32> to vector<8x128xf32>
    %28 = arith.mulf %27, %26 : vector<8x128xf32>
    %29 = arith.addf %19, %28 : vector<8x128xf32>
    %30 = vector.extract_strided_slice %7 {offsets = [0, 2], sizes = [8, 1], strides = [1, 1]} : vector<8x8xf32> to vector<8x1xf32>
    %31 = vector.extract_strided_slice %6 {offsets = [2, 0], sizes = [1, 128], strides = [1, 1]} : vector<8x128xf32> to vector<1x128xf32>
    %32 = vector.extract_strided_slice %8 {offsets = [0, 2], sizes = [1, 1], strides = [1, 1]} : vector<1x8xf32> to vector<1x1xf32>
    %33 = vector.broadcast %30 : vector<8x1xf32> to vector<8x128xf32>
    %34 = vector.broadcast %31 : vector<1x128xf32> to vector<8x128xf32>
    %35 = arith.addf %33, %34 : vector<8x128xf32>
    %36 = math.tanh %35 : vector<8x128xf32>
    %37 = vector.broadcast %32 : vector<1x1xf32> to vector<8x128xf32>
    %38 = arith.mulf %37, %36 : vector<8x128xf32>
    %39 = arith.addf %29, %38 : vector<8x128xf32>
    %40 = vector.extract_strided_slice %7 {offsets = [0, 3], sizes = [8, 1], strides = [1, 1]} : vector<8x8xf32> to vector<8x1xf32>
    %41 = vector.extract_strided_slice %6 {offsets = [3, 0], sizes = [1, 128], strides = [1, 1]} : vector<8x128xf32> to vector<1x128xf32>
    %42 = vector.extract_strided_slice %8 {offsets = [0, 3], sizes = [1, 1], strides = [1, 1]} : vector<1x8xf32> to vector<1x1xf32>
    %43 = vector.broadcast %40 : vector<8x1xf32> to vector<8x128xf32>
    %44 = vector.broadcast %41 : vector<1x128xf32> to vector<8x128xf32>
    %45 = arith.addf %43, %44 : vector<8x128xf32>
    %46 = math.tanh %45 : vector<8x128xf32>
    %47 = vector.broadcast %42 : vector<1x1xf32> to vector<8x128xf32>
    %48 = arith.mulf %47, %46 : vector<8x128xf32>
    %49 = arith.addf %39, %48 : vector<8x128xf32>
    %50 = vector.extract_strided_slice %7 {offsets = [0, 4], sizes = [8, 1], strides = [1, 1]} : vector<8x8xf32> to vector<8x1xf32>
    %51 = vector.extract_strided_slice %6 {offsets = [4, 0], sizes = [1, 128], strides = [1, 1]} : vector<8x128xf32> to vector<1x128xf32>
    %52 = vector.extract_strided_slice %8 {offsets = [0, 4], sizes = [1, 1], strides = [1, 1]} : vector<1x8xf32> to vector<1x1xf32>
    %53 = vector.broadcast %50 : vector<8x1xf32> to vector<8x128xf32>
    %54 = vector.broadcast %51 : vector<1x128xf32> to vector<8x128xf32>
    %55 = arith.addf %53, %54 : vector<8x128xf32>
    %56 = math.tanh %55 : vector<8x128xf32>
    %57 = vector.broadcast %52 : vector<1x1xf32> to vector<8x128xf32>
    %58 = arith.mulf %57, %56 : vector<8x128xf32>
    %59 = arith.addf %49, %58 : vector<8x128xf32>
    %60 = vector.extract_strided_slice %7 {offsets = [0, 5], sizes = [8, 1], strides = [1, 1]} : vector<8x8xf32> to vector<8x1xf32>
    %61 = vector.extract_strided_slice %6 {offsets = [5, 0], sizes = [1, 128], strides = [1, 1]} : vector<8x128xf32> to vector<1x128xf32>
    %62 = vector.extract_strided_slice %8 {offsets = [0, 5], sizes = [1, 1], strides = [1, 1]} : vector<1x8xf32> to vector<1x1xf32>
    %63 = vector.broadcast %60 : vector<8x1xf32> to vector<8x128xf32>
    %64 = vector.broadcast %61 : vector<1x128xf32> to vector<8x128xf32>
    %65 = arith.addf %63, %64 : vector<8x128xf32>
    %66 = math.tanh %65 : vector<8x128xf32>
    %67 = vector.broadcast %62 : vector<1x1xf32> to vector<8x128xf32>
    %68 = arith.mulf %67, %66 : vector<8x128xf32>
    %69 = arith.addf %59, %68 : vector<8x128xf32>
    %70 = vector.extract_strided_slice %7 {offsets = [0, 6], sizes = [8, 1], strides = [1, 1]} : vector<8x8xf32> to vector<8x1xf32>
    %71 = vector.extract_strided_slice %6 {offsets = [6, 0], sizes = [1, 128], strides = [1, 1]} : vector<8x128xf32> to vector<1x128xf32>
    %72 = vector.extract_strided_slice %8 {offsets = [0, 6], sizes = [1, 1], strides = [1, 1]} : vector<1x8xf32> to vector<1x1xf32>
    %73 = vector.broadcast %70 : vector<8x1xf32> to vector<8x128xf32>
    %74 = vector.broadcast %71 : vector<1x128xf32> to vector<8x128xf32>
    %75 = arith.addf %73, %74 : vector<8x128xf32>
    %76 = math.tanh %75 : vector<8x128xf32>
    %77 = vector.broadcast %72 : vector<1x1xf32> to vector<8x128xf32>
    %78 = arith.mulf %77, %76 : vector<8x128xf32>
    %79 = arith.addf %69, %78 : vector<8x128xf32>
    %80 = vector.extract_strided_slice %7 {offsets = [0, 7], sizes = [8, 1], strides = [1, 1]} : vector<8x8xf32> to vector<8x1xf32>
    %81 = vector.extract_strided_slice %6 {offsets = [7, 0], sizes = [1, 128], strides = [1, 1]} : vector<8x128xf32> to vector<1x128xf32>
    %82 = vector.extract_strided_slice %8 {offsets = [0, 7], sizes = [1, 1], strides = [1, 1]} : vector<1x8xf32> to vector<1x1xf32>
    %83 = vector.broadcast %80 : vector<8x1xf32> to vector<8x128xf32>
    %84 = vector.broadcast %81 : vector<1x128xf32> to vector<8x128xf32>
    %85 = arith.addf %83, %84 : vector<8x128xf32>
    %86 = math.tanh %85 : vector<8x128xf32>
    %87 = vector.broadcast %82 : vector<1x1xf32> to vector<8x128xf32>
    %88 = arith.mulf %87, %86 : vector<8x128xf32>
    %89 = arith.addf %79, %88 : vector<8x128xf32>
    %90 = tpu.iota {dimensions = array<i32: 1>} : vector<8x128xi32>
    %c128_i32 = arith.constant 128 : i32
    %91 = arith.muli %arg2, %c128_i32 : i32
    %92 = vector.broadcast %91 : i32 to vector<8x128xi32>
    %93 = arith.addi %90, %92 : vector<8x128xi32>
    %94 = arith.index_cast %arg0 : i32 to index
    %95 = memref.load %arg3[%94] : memref<2xi32, #tpu.memory_space<smem>>
    %96 = vector.broadcast %95 : i32 to vector<8x128xi32>
    %97 = arith.cmpi slt, %93, %96 : vector<8x128xi32>
    %cst_10 = arith.constant -1.000000e+06 : f32
    %98 = vector.broadcast %cst_10 : f32 to vector<8x128xf32>
    %99 = arith.select %97, %89, %98 : vector<8x128xi1>, vector<8x128xf32>
    %c0_11 = arith.constant 0 : index
    %c0_12 = arith.constant 0 : index
    %100 = vector.load %arg12[%c0_11, %c0_12] : memref<8x1xf32, #tpu.memory_space<vmem>>, vector<8x1xf32>
    %cst_13 = arith.constant dense<0xFF800000> : vector<8xf32>
    %101 = vector.multi_reduction <maximumf>, %99, %cst_13 [1] : vector<8x128xf32> to vector<8xf32>
    %102 = vector.shape_cast %101 : vector<8xf32> to vector<8x1xf32>
    %103 = arith.maximumf %100, %102 : vector<8x1xf32>
    %104 = arith.subf %100, %103 : vector<8x1xf32>
    %105 = math.exp %104 : vector<8x1xf32>
    %106 = vector.broadcast %103 : vector<8x1xf32> to vector<8x128xf32>
    %107 = arith.subf %99, %106 : vector<8x128xf32>
    %108 = math.exp %107 : vector<8x128xf32>
    %c10_i32 = arith.constant 10 : i32
    %109 = vector.broadcast %c10_i32 : i32 to vector<8x128xi32>
    %110 = arith.cmpi slt, %93, %109 : vector<8x128xi32>
    %cst_14 = arith.constant 0.000000e+00 : f32
    %111 = vector.broadcast %cst_14 : f32 to vector<8x128xf32>
    %112 = arith.select %110, %108, %111 : vector<8x128xi1>, vector<8x128xf32>
    %c0_15 = arith.constant 0 : index
    %c0_16 = arith.constant 0 : index
    %113 = vector.load %arg13[%c0_15, %c0_16] : memref<8x1xf32, #tpu.memory_space<vmem>>, vector<8x1xf32>
    %114 = arith.mulf %105, %113 : vector<8x1xf32>
    %cst_17 = arith.constant dense<0.000000e+00> : vector<8xf32>
    %115 = vector.multi_reduction <add>, %112, %cst_17 [1] : vector<8x128xf32> to vector<8xf32>
    %116 = vector.shape_cast %115 : vector<8xf32> to vector<8x1xf32>
    %117 = arith.addf %114, %116 : vector<8x1xf32>
    %c0_18 = arith.constant 0 : index
    %c0_19 = arith.constant 0 : index
    %118 = vector.load %arg13[%c0_18, %c0_19] : memref<8x1xf32, #tpu.memory_space<vmem>>, vector<8x1xf32>
    tpu.vector_store %arg13[%c0_18, %c0_19], %117 {strides = array<i32>} : memref<8x1xf32, #tpu.memory_space<vmem>>, vector<8x1xf32>,
    %c0_20 = arith.constant 0 : index
    %c0_21 = arith.constant 0 : index
    %119 = vector.load %arg14[%c0_20, %c0_21] : memref<8x128xf32, #tpu.memory_space<vmem>>, vector<8x128xf32>
    %120 = vector.broadcast %105 : vector<8x1xf32> to vector<8x128xf32>
    %121 = arith.mulf %120, %119 : vector<8x128xf32>
    %c0_22 = arith.constant 0 : index
    %c0_23 = arith.constant 0 : index
    %c0_24 = arith.constant 0 : index
    %122 = vector.load %arg6[%c0_22, %c0_23, %c0_24] : memref<1x128x128xf32, #tpu.memory_space<vmem>>, vector<1x128x128xf32>
    %123 = vector.shape_cast %122 : vector<1x128x128xf32> to vector<128x128xf32>
    %cst_25 = arith.constant dense<0.000000e+00> : vector<8x128xf32>
    %124 = tpu.matmul %112, %123, %cst_25 {dimension_numbers = #tpu.dot_dimension_numbers<[1], [0], [0], [1], [0, 0, 1, 1], [], []>} : vector<8x128xf32>, vector<128x128xf32>, vector<8x128xf32> -> vector<8x128xf32>
    %125 = arith.addf %121, %124 : vector<8x128xf32>
    %c0_26 = arith.constant 0 : index
    %c0_27 = arith.constant 0 : index
    %126 = vector.load %arg14[%c0_26, %c0_27] : memref<8x128xf32, #tpu.memory_space<vmem>>, vector<8x128xf32>
    tpu.vector_store %arg14[%c0_26, %c0_27], %125 {strides = array<i32>} : memref<8x128xf32, #tpu.memory_space<vmem>>, vector<8x128xf32>,
    %c0_28 = arith.constant 0 : index
    %c0_29 = arith.constant 0 : index
    %127 = vector.load %arg12[%c0_28, %c0_29] : memref<8x1xf32, #tpu.memory_space<vmem>>, vector<8x1xf32>
    tpu.vector_store %arg12[%c0_28, %c0_29], %103 {strides = array<i32>} : memref<8x1xf32, #tpu.memory_space<vmem>>, vector<8x1xf32>,
    %c0_i32_30 = arith.constant 0 : i32
    %128 = arith.cmpi eq, %arg2, %c0_i32_30 : i32
    %129 = arith.extui %128 : i1 to i32
    %c0_i32_31 = arith.constant 0 : i32
    %130 = arith.cmpi ne, %129, %c0_i32_31 : i32
    scf.if %130 {
      %c0_32 = arith.constant 0 : index
      %c0_33 = arith.constant 0 : index
      %131 = vector.load %arg13[%c0_32, %c0_33] : memref<8x1xf32, #tpu.memory_space<vmem>>, vector<8x1xf32>
      %132 = tpu.reciprocal %131 {approx = true} : vector<8x1xf32> -> vector<8x1xf32>
      %c0_34 = arith.constant 0 : index
      %c0_35 = arith.constant 0 : index
      %133 = vector.load %arg14[%c0_34, %c0_35] : memref<8x128xf32, #tpu.memory_space<vmem>>, vector<8x128xf32>
      %134 = vector.broadcast %132 : vector<8x1xf32> to vector<8x128xf32>
      %135 = arith.mulf %133, %134 : vector<8x128xf32>
      %c0_36 = arith.constant 0 : index
      %c0_37 = arith.constant 0 : index
      %c0_38 = arith.constant 0 : index
      %136 = vector.load %arg10[%c0_36, %c0_37, %c0_38] : memref<1x8x128xf32, #tpu.memory_space<vmem>>, vector<1x8x128xf32>
      %137 = vector.shape_cast %136 : vector<1x8x128xf32> to vector<8x128xf32>
      %138 = vector.shape_cast %135 : vector<8x128xf32> to vector<1x8x128xf32>
      tpu.vector_store %arg10[%c0_36, %c0_37, %c0_38], %138 {strides = array<i32>} : memref<1x8x128xf32, #tpu.memory_space<vmem>>, vector<1x8x128xf32>,
    } else {
    }
    return
  }
  func.func @transform_0(%arg0: i32, %arg1: i32, %arg2: i32, %arg3: memref<2xi32, #tpu.memory_space<smem>>) -> (i32, i32, i32) {
    %c0_i32 = arith.constant 0 : i32
    %c0_i32_0 = arith.constant 0 : i32
    return %arg0, %arg1, %c0_i32 : i32, i32, i32
  }
  func.func @transform_1(%arg0: i32, %arg1: i32, %arg2: i32, %arg3: memref<2xi32, #tpu.memory_space<smem>>) -> (i32, i32, i32) {
    %c0_i32 = arith.constant 0 : i32
    %c0_i32_0 = arith.constant 0 : i32
    return %arg0, %c0_i32, %arg2 : i32, i32, i32
  }
  func.func @transform_2(%arg0: i32, %arg1: i32, %arg2: i32, %arg3: memref<2xi32, #tpu.memory_space<smem>>) -> (i32, i32, i32) {
    %c0_i32 = arith.constant 0 : i32
    %c0_i32_0 = arith.constant 0 : i32
    return %arg0, %arg2, %c0_i32 : i32, i32, i32
  }
  func.func @transform_3(%arg0: i32, %arg1: i32, %arg2: i32, %arg3: memref<2xi32, #tpu.memory_space<smem>>) -> (i32, i32) {
    %c0_i32 = arith.constant 0 : i32
    %c0_i32_0 = arith.constant 0 : i32
    %c0_i32_1 = arith.constant 0 : i32
    return %c0_i32, %c0_i32_0 : i32, i32
  }
  func.func @transform_4(%arg0: i32, %arg1: i32, %arg2: i32, %arg3: memref<2xi32, #tpu.memory_space<smem>>) -> (i32, i32) {
    %c0_i32 = arith.constant 0 : i32
    %c0_i32_0 = arith.constant 0 : i32
    %c0_i32_1 = arith.constant 0 : i32
    return %c0_i32, %c0_i32_0 : i32, i32
  }
  func.func @transform_5(%arg0: i32, %arg1: i32, %arg2: i32, %arg3: memref<2xi32, #tpu.memory_space<smem>>) -> (i32, i32) {
    %c0_i32 = arith.constant 0 : i32
    %c0_i32_0 = arith.constant 0 : i32
    %c0_i32_1 = arith.constant 0 : i32
    return %c0_i32, %c0_i32_0 : i32, i32
  }
  func.func @transform_6(%arg0: i32, %arg1: i32, %arg2: i32, %arg3: memref<2xi32, #tpu.memory_space<smem>>) -> (i32, i32, i32) {
    %c0_i32 = arith.constant 0 : i32
    %c0_i32_0 = arith.constant 0 : i32
    return %arg0, %arg1, %c0_i32 : i32, i32, i32
  }
}

</mosaic_0001>

<llo_original>
// kernel: tpu_custom_call.1
$region0: #{tpu_custom_call.1}
  #allocation0 [shape = 'u32[]', space=smem, size = 0x4, offset = 0x4, fixed_abs, tag = 'smem constant byte address 0x4 - core index']
  #allocation1 [shape = 'u32[72,128]{1,0:T(1,128)}', space=vmem, size = 0x9000, scoped, tag = 'internal scratch']
  #allocation2 [shape = 'f32[8,8]{1,0:T(8,128)}', space=vmem, size = 0x1000, scoped, tag = 'scratch operand']
  #allocation3 [shape = 'f32[8,1]{1,0:T(8,128)}', space=vmem, size = 0x1000, scoped, tag = 'scratch operand']
  #allocation4 [shape = 'f32[8,1]{1,0:T(8,128)}', space=vmem, size = 0x1000, scoped, tag = 'scratch operand']
  #allocation5 [shape = 'f32[8,128]{1,0:T(8,128)}', space=vmem, size = 0x1000, scoped, tag = 'scratch operand']
  #allocation6 [shape = 's32[1]{0}', space=sflag, size = 0x4, scoped, tag = 'scoped memory for tpu_custom_call.1']
  #allocation7 [shape = 'u8[512]{0}', space=smem, size = 0x200, scoped, tag = 'prefetched SMEM operand 0']
  %s0 = inlined_call_operand.vmem [shape: s32[2], index: 0, kind: input, shape index: {}]
  %s1 = inlined_call_operand.vmem [shape: f32[2,8,128], index: 1, kind: input, shape index: {}]
  %s2 = inlined_call_operand.vmem [shape: f32[2,8,128], index: 2, kind: input, shape index: {}]
  %s3 = inlined_call_operand.hbm [shape: f32[2,128,128], index: 3, kind: input, shape index: {}]
  %s4 = inlined_call_operand.vmem [shape: f32[128,8], index: 4, kind: input, shape index: {}]
  %s5 = inlined_call_operand.vmem [shape: f32[8,8], index: 5, kind: input, shape index: {}]
  %s6 = inlined_call_operand.vmem [shape: f32[1,8], index: 6, kind: input, shape index: {}]
  %s7 = inlined_call_operand.hbm [shape: f32[2,8,128], index: 7, kind: output, shape index: {}]
  %s8 = sld [smem:[#allocation0]]
  $region69: #{tpu_custom_call.1} parent=0
    _
  %s10 = ssub.s32 1, %s8
  %s11 = scalar_select 0, %s10, %s8
  %s13 = sshll.u32 %s0, 4
  %s14 = int_to_ptr.vmem [resolvable:$true] %s13
  %16 = dma.vmem_to_smem %s14, 16, [#allocation7], [#allocation6]
  %18 = dma.done [#allocation6], 16
  %19 = sfence
  $region1: #{tpu_custom_call.1} parent=0
    #allocation8 [shape = 'u8[131072]{0}', space=vmem, size = 0x20000, scoped, tag = 'input window, operand 3']
    #allocation9 [shape = 's32[2]{0}', space=sflag, size = 0x8, scoped, tag = 'scoped memory for tpu_custom_call.1']
    #allocation10 [shape = 's32[2]{0}', space=sflag, size = 0x8, scoped, tag = 'scoped memory for tpu_custom_call.1']
    #allocation11 [shape = 'u8[8192]{0}', space=vmem, size = 0x2000, scoped, tag = 'output window, operand 0']
    %20 = vsyncpa [#allocation9], 0
    %s21 = scalar_lea.sflag [#allocation9], 1
    %22 = vsyncpa %s21, 0
    %23 = vsyncpa [#allocation10], 0
    %s24 = scalar_lea.sflag [#allocation10], 1
    %25 = vsyncpa %s24, 0
    loop: start=0, step=1, limit=4
    $region2: #{tpu_custom_call.1} parent=1 // loop_pre_header
      _
    $region3: #{tpu_custom_call.1} parent=1 // loop_header
      %s27 = sphi 0, %s31
      %p28 = scmp.ge.s32.totalorder %s27, 4
      %s34 = sphi 0, %s53
      %s35 = sphi 0, %s49
      %s36 = sphi 0, %s45
      %s37 = sphi 0, %s34
      %s38 = sphi 0, %s35
      %s39 = sphi 0, %s36
      %s40 = sphi 0, %s37
      %s41 = sphi 0, %s38
      %s42 = sphi 0, %s39
      %s58 = sphi 0, %s60
      %s61 = sphi 0, %s58
      %s62 = sphi 0, %s61
      %s78 = sphi 0, %s62
      %s86 = sphi 0, %s88
      %s89 = sphi 0, %s86
      %s90 = sphi 0, %s89
      %s106 = sphi 0, %s90
      %s114 = sphi 0, %s116
      %s117 = sphi 0, %s114
      %s118 = sphi 0, %s117
      %s134 = sphi 0, %s118
      %s138 = sphi 0, %s138
      %s140 = sphi 0, %s138
      %s141 = sphi 0, %s140
      %s155 = sphi 0, %s141
      %s159 = sphi 0, %s159
      %s161 = sphi 0, %s159
      %s162 = sphi 0, %s161
      %s176 = sphi 0, %s162
      %s180 = sphi 0, %s180
      %s182 = sphi 0, %s180
      %s183 = sphi 0, %s182
      %s197 = sphi 0, %s183
      %s205 = sphi 0, %s207
      %s208 = sphi 0, %s205
      %s209 = sphi 0, %s208
      %s225 = sphi 0, %s209
    $region4: #{tpu_custom_call.1} parent=1 // loop_header_branch
      %30 = sbr.rel (%p28) target = $region8
    $region5: #{tpu_custom_call.1} parent=1 // loop_body
      %s32 = ssub.s32 %s27, 1
      %s33 = ssub.s32 %s27, 2
      %s43 = sadd.s32 1, %s36
      %p44 = scmp.ge.s32.totalorder %s43, 1
      %s45 = scalar_select %p44, 0, %s43
      %s46 = sadd.s32 1, %s35
      %s47 = scalar_select %p44, %s46, %s35
      %p48 = scmp.ge.s32.totalorder %s47, 1
      %s49 = scalar_select %p48, 0, %s47
      %s50 = sadd.s32 1, %s34
      %s51 = scalar_select %p48, %s50, %s34
      %p52 = scmp.ge.s32.totalorder %s51, 2
      %s53 = scalar_select %p52, 0, %s51
      %s54 = ssub.s32 %s34, %s53
      %s55 = ssub.s32 %s35, %s49
      %s56 = sor.u32 %s54, %s55
      %p57 = scmp.eq.s32.totalorder %s56, 0
      %s59 = sadd.s32 %s58, 1
      %s60 = scalar_select %p57, %s58, %s59
      %p63 = pneg %p57
      %p64 = scmp.eq.s32.totalorder %s27, 1
      %p65 = por %p63, %p64
      %p66 = scmp.ne.s32.totalorder %s58, %s61
      %p67 = scmp.eq.s32.totalorder %s27, 0
      %p68 = por %p66, %p67
      %p69 = scmp.ne.s32.totalorder %s58, %s61
      %p70 = scmp.eq.s32.totalorder %s32, 1
      %p71 = por %p69, %p70
      %p72 = scmp.ne.s32.totalorder %s61, %s62
      %p73 = scmp.eq.s32.totalorder %s32, 0
      %p74 = por %p72, %p73
      %p75 = scmp.ne.s32.totalorder %s61, %s62
      %p76 = scmp.eq.s32.totalorder %s33, 1
      %p77 = por %p75, %p76
      %p79 = scmp.ne.s32.totalorder %s62, %s78
      %p80 = scmp.eq.s32.totalorder %s33, 0
      %p81 = por %p79, %p80
      %s82 = ssub.s32 %s34, %s53
      %s83 = ssub.s32 %s36, %s45
      %s84 = sor.u32 %s82, %s83
      %p85 = scmp.eq.s32.totalorder %s84, 0
      %s87 = sadd.s32 %s86, 1
      %s88 = scalar_select %p85, %s86, %s87
      %p91 = pneg %p85
      %p92 = scmp.eq.s32.totalorder %s27, 1
      %p93 = por %p91, %p92
      %p94 = scmp.ne.s32.totalorder %s86, %s89
      %p95 = scmp.eq.s32.totalorder %s27, 0
      %p96 = por %p94, %p95
      %p97 = scmp.ne.s32.totalorder %s86, %s89
      %p98 = scmp.eq.s32.totalorder %s32, 1
      %p99 = por %p97, %p98
      %p100 = scmp.ne.s32.totalorder %s89, %s90
      %p101 = scmp.eq.s32.totalorder %s32, 0
      %p102 = por %p100, %p101
      %p103 = scmp.ne.s32.totalorder %s89, %s90
      %p104 = scmp.eq.s32.totalorder %s33, 1
      %p105 = por %p103, %p104
      %p107 = scmp.ne.s32.totalorder %s90, %s106
      %p108 = scmp.eq.s32.totalorder %s33, 0
      %p109 = por %p107, %p108
      %s110 = ssub.s32 %s34, %s53
      %s111 = ssub.s32 %s36, %s45
      %s112 = sor.u32 %s110, %s111
      %p113 = scmp.eq.s32.totalorder %s112, 0
      %s115 = sadd.s32 %s114, 1
      %s116 = scalar_select %p113, %s114, %s115
      %p119 = pneg %p113
      %p120 = scmp.eq.s32.totalorder %s27, 1
      %p121 = por %p119, %p120
      %p122 = scmp.ne.s32.totalorder %s114, %s117
      %p123 = scmp.eq.s32.totalorder %s27, 0
      %p124 = por %p122, %p123
      %p125 = scmp.ne.s32.totalorder %s114, %s117
      %p126 = scmp.eq.s32.totalorder %s32, 1
      %p127 = por %p125, %p126
      %p128 = scmp.ne.s32.totalorder %s117, %s118
      %p129 = scmp.eq.s32.totalorder %s32, 0
      %p130 = por %p128, %p129
      %p131 = scmp.ne.s32.totalorder %s117, %s118
      %p132 = scmp.eq.s32.totalorder %s33, 1
      %p133 = por %p131, %p132
      %p135 = scmp.ne.s32.totalorder %s118, %s134
      %p136 = scmp.eq.s32.totalorder %s33, 0
      %p137 = por %p135, %p136
      %s139 = sadd.s32 %s138, 1
      %p142 = scmp.eq.s32.totalorder %s27, 1
      %p143 = scmp.ne.s32.totalorder %s138, %s140
      %p144 = scmp.eq.s32.totalorder %s27, 0
      %p145 = por %p143, %p144
      %p146 = scmp.ne.s32.totalorder %s138, %s140
      %p147 = scmp.eq.s32.totalorder %s32, 1
      %p148 = por %p146, %p147
      %p149 = scmp.ne.s32.totalorder %s140, %s141
      %p150 = scmp.eq.s32.totalorder %s32, 0
      %p151 = por %p149, %p150
      %p152 = scmp.ne.s32.totalorder %s140, %s141
      %p153 = scmp.eq.s32.totalorder %s33, 1
      %p154 = por %p152, %p153
      %p156 = scmp.ne.s32.totalorder %s141, %s155
      %p157 = scmp.eq.s32.totalorder %s33, 0
      %p158 = por %p156, %p157
      %s160 = sadd.s32 %s159, 1
      %p163 = scmp.eq.s32.totalorder %s27, 1
      %p164 = scmp.ne.s32.totalorder %s159, %s161
      %p165 = scmp.eq.s32.totalorder %s27, 0
      %p166 = por %p164, %p165
      %p167 = scmp.ne.s32.totalorder %s159, %s161
      %p168 = scmp.eq.s32.totalorder %s32, 1
      %p169 = por %p167, %p168
      %p170 = scmp.ne.s32.totalorder %s161, %s162
      %p171 = scmp.eq.s32.totalorder %s32, 0
      %p172 = por %p170, %p171
      %p173 = scmp.ne.s32.totalorder %s161, %s162
      %p174 = scmp.eq.s32.totalorder %s33, 1
      %p175 = por %p173, %p174
      %p177 = scmp.ne.s32.totalorder %s162, %s176
      %p178 = scmp.eq.s32.totalorder %s33, 0
      %p179 = por %p177, %p178
      %s181 = sadd.s32 %s180, 1
      %p184 = scmp.eq.s32.totalorder %s27, 1
      %p185 = scmp.ne.s32.totalorder %s180, %s182
      %p186 = scmp.eq.s32.totalorder %s27, 0
      %p187 = por %p185, %p186
      %p188 = scmp.ne.s32.totalorder %s180, %s182
      %p189 = scmp.eq.s32.totalorder %s32, 1
      %p190 = por %p188, %p189
      %p191 = scmp.ne.s32.totalorder %s182, %s183
      %p192 = scmp.eq.s32.totalorder %s32, 0
      %p193 = por %p191, %p192
      %p194 = scmp.ne.s32.totalorder %s182, %s183
      %p195 = scmp.eq.s32.totalorder %s33, 1
      %p196 = por %p194, %p195
      %p198 = scmp.ne.s32.totalorder %s183, %s197
      %p199 = scmp.eq.s32.totalorder %s33, 0
      %p200 = por %p198, %p199
      %s201 = ssub.s32 %s34, %s53
      %s202 = ssub.s32 %s35, %s49
      %s203 = sor.u32 %s201, %s202
      %p204 = scmp.eq.s32.totalorder %s203, 0
      %s206 = sadd.s32 %s205, 1
      %s207 = scalar_select %p204, %s205, %s206
      %p210 = pneg %p204
      %p211 = scmp.eq.s32.totalorder %s27, 1
      %p212 = por %p210, %p211
      %p213 = scmp.ne.s32.totalorder %s205, %s208
      %p214 = scmp.eq.s32.totalorder %s27, 0
      %p215 = por %p213, %p214
      %p216 = scmp.ne.s32.totalorder %s205, %s208
      %p217 = scmp.eq.s32.totalorder %s32, 1
      %p218 = por %p216, %p217
      %p219 = scmp.ne.s32.totalorder %s208, %s209
      %p220 = scmp.eq.s32.totalorder %s32, 0
      %p221 = por %p219, %p220
      %p222 = scmp.ne.s32.totalorder %s208, %s209
      %p223 = scmp.eq.s32.totalorder %s33, 1
      %p224 = por %p222, %p223
      %p226 = scmp.ne.s32.totalorder %s209, %s225
      %p227 = scmp.eq.s32.totalorder %s33, 0
      %p228 = por %p226, %p227
      %p229 = scmp.le.s32.totalorder 1, %s27
      %p230 = scmp.lt.s32.totalorder %s27, 3
      %p231 = pnand %p229, %p230
      %p232 = pneg %p231
      // Predicated region
      $region9: #{tpu_custom_call.1} parent=5 // pred_check
        _
      $region10: #{tpu_custom_call.1} parent=5 // pred_check_branch
        %234 = sbr.rel (%p231) target = $region12
      $region11: #{tpu_custom_call.1} parent=5 // pred_region
        %s235 = ssub.s32 %s27, 1
        // Predicated region
        $region13: #{tpu_custom_call.1} parent=11 // pred_check
          %p236 = pneg %p151
        $region14: #{tpu_custom_call.1} parent=11 // pred_check_branch
          %238 = sbr.rel (%p236) target = $region16
        $region15: #{tpu_custom_call.1} parent=11 // pred_region
          _
        $region16: #{tpu_custom_call.1} parent=11 // pred_fallthru
          _
        // Predicated region
        $region17: #{tpu_custom_call.1} parent=11 // pred_check
          %p239 = pneg %p172
        $region18: #{tpu_custom_call.1} parent=11 // pred_check_branch
          %241 = sbr.rel (%p239) target = $region20
        $region19: #{tpu_custom_call.1} parent=11 // pred_region
          _
        $region20: #{tpu_custom_call.1} parent=11 // pred_fallthru
          _
        // Predicated region
        $region21: #{tpu_custom_call.1} parent=11 // pred_check
          %p242 = pneg %p193
        $region22: #{tpu_custom_call.1} parent=11 // pred_check_branch
          %244 = sbr.rel (%p242) target = $region24
        $region23: #{tpu_custom_call.1} parent=11 // pred_region
          _
        $region24: #{tpu_custom_call.1} parent=11 // pred_fallthru
          _
      $region12: #{tpu_custom_call.1} parent=5 // pred_fallthru
        _
      %p245 = scmp.lt.s32.totalorder %s27, 2
      // Predicated region
      $region25: #{tpu_custom_call.1} parent=5 // pred_check
        %p246 = pneg %p245
      $region26: #{tpu_custom_call.1} parent=5 // pred_check_branch
        %248 = sbr.rel (%p246) target = $region28
      $region27: #{tpu_custom_call.1} parent=5 // pred_region
        // Predicated region
        $region29: #{tpu_custom_call.1} parent=27 // pred_check
          %p249 = pneg %p68
        $region30: #{tpu_custom_call.1} parent=27 // pred_check_branch
          %251 = sbr.rel (%p249) target = $region32
        $region31: #{tpu_custom_call.1} parent=27 // pred_region
          %p252 = scmp.lt.s32.totalorder %s34, 1
          %s253 = scalar_select %p252, %s34, 1
          %p254 = scmp.lt.s32.totalorder %s35, 0
          %s255 = scalar_select %p254, %s35, 0
          %s256 = sadd.s32 %s255, %s253
          %s257 = smul.addr %s256, 8
          %s258 = scalar_lea.vmem %s1, %s257
        $region32: #{tpu_custom_call.1} parent=27 // pred_fallthru
          _
        // Predicated region
        $region33: #{tpu_custom_call.1} parent=27 // pred_check
          %p259 = pneg %p96
        $region34: #{tpu_custom_call.1} parent=27 // pred_check_branch
          %261 = sbr.rel (%p259) target = $region36
        $region35: #{tpu_custom_call.1} parent=27 // pred_region
          %p262 = scmp.lt.s32.totalorder %s34, 1
          %s263 = scalar_select %p262, %s34, 1
          %p264 = scmp.lt.s32.totalorder %s36, 0
          %s265 = scalar_select %p264, %s36, 0
          %s266 = sadd.s32 %s265, %s263
          %s267 = smul.addr %s266, 8
          %s268 = scalar_lea.vmem %s2, %s267
        $region36: #{tpu_custom_call.1} parent=27 // pred_fallthru
          _
        // Predicated region
        $region37: #{tpu_custom_call.1} parent=27 // pred_check
          %p269 = pneg %p124
        $region38: #{tpu_custom_call.1} parent=27 // pred_check_branch
          %271 = sbr.rel (%p269) target = $region40
        $region39: #{tpu_custom_call.1} parent=27 // pred_region
          %s272 = sand.u32 %s114, 1
          %s273 = scalar_lea.sflag [#allocation9], %s272
          %s274 = sand.u32 %s114, 1
          %s275 = smul.addr %s274, 128
          %s276 = scalar_lea.vmem [#allocation8], %s275
          %s277 = smul.u32 16, %s36
          %279 = vsyncadd %s273, 0
          %s280 = smul.addr %s34, 16
          %s281 = sadd.s32 %s277, %s280
          %s282 = smul.addr %s281, 8
          %s283 = scalar_lea.hbm %s3, %s282
          %s284 = sshll.u32 %s283, 4
          %s285 = int_to_ptr.hbm [resolvable:$true] %s284
          %s286 = sshll.u32 %s276, 4
          %s287 = int_to_ptr.vmem [resolvable:$true] %s286
          %292 = dma.hbm_to_vmem [thread:$0]  %s285, 2048, %s287, %s273, 128, 128, 8
        $region40: #{tpu_custom_call.1} parent=27 // pred_fallthru
          _
      $region28: #{tpu_custom_call.1} parent=5 // pred_fallthru
        _
      %p293 = scmp.le.s32.totalorder 1, %s27
      %p294 = scmp.lt.s32.totalorder %s27, 3
      %p295 = pnand %p293, %p294
      %p296 = pneg %p295
      // Predicated region
      $region41: #{tpu_custom_call.1} parent=5 // pred_check
        _
      $region42: #{tpu_custom_call.1} parent=5 // pred_check_branch
        %298 = sbr.rel (%p295) target = $region44
      $region43: #{tpu_custom_call.1} parent=5 // pred_region
        %s299 = ssub.s32 %s27, 1
        %s300 = sand.u32 %s117, 1
        %s301 = scalar_lea.sflag [#allocation9], %s300
        %s302 = sand.u32 %s117, 1
        %s303 = smul.addr %s302, 128
        %s304 = scalar_lea.vmem [#allocation8], %s303
        // Predicated region
        $region45: #{tpu_custom_call.1} parent=43 // pred_check
          %p305 = pneg %p130
        $region46: #{tpu_custom_call.1} parent=43 // pred_check_branch
          %307 = sbr.rel (%p305) target = $region48
        $region47: #{tpu_custom_call.1} parent=43 // pred_region
          %309 = dma.done %s301, 2048
        $region48: #{tpu_custom_call.1} parent=43 // pred_fallthru
          _
        %p310 = scmp.lt.s32.totalorder %s37, 1
        %s311 = scalar_select %p310, %s37, 1
        %p312 = scmp.lt.s32.totalorder %s38, 0
        %s313 = scalar_select %p312, %s38, 0
        %s314 = sadd.s32 %s313, %s311
        %s315 = smul.addr %s314, 8
        %s316 = scalar_lea.vmem %s1, %s315
        %p317 = pneg %p74
        %p318 = pneg %p71
        %p319 = scmp.lt.s32.totalorder %s37, 1
        %s320 = scalar_select %p319, %s37, 1
        %p321 = scmp.lt.s32.totalorder %s39, 0
        %s322 = scalar_select %p321, %s39, 0
        %s323 = sadd.s32 %s322, %s320
        %s324 = smul.addr %s323, 8
        %s325 = scalar_lea.vmem %s2, %s324
        %p326 = pneg %p102
        %p327 = pneg %p99
        %s328 = sand.u32 %s117, 1
        %s329 = scalar_lea.sflag [#allocation9], %s328
        %s330 = sand.u32 %s117, 1
        %s331 = smul.addr %s330, 128
        %s332 = scalar_lea.vmem [#allocation8], %s331
        %p333 = pneg %p130
        %p334 = pneg %p127
        %p335 = pneg %p151
        %p336 = pneg %p148
        %p337 = pneg %p172
        %p338 = pneg %p169
        %p339 = pneg %p193
        %p340 = pneg %p190
        %p341 = pneg %p221
        %p342 = pneg %p218
        %s343 = sand.u32 %s208, 1
        %s344 = scalar_lea.sflag [#allocation10], %s343
        %s345 = sand.u32 %s208, 1
        %s346 = smul.addr %s345, 8
        %s347 = scalar_lea.vmem [#allocation11], %s346
        %p348 = scmp.lt.s32.totalorder %s37, 1
        %s349 = scalar_select %p348, %s37, 1
        %p350 = scmp.lt.s32.totalorder %s38, 0
        %s351 = scalar_select %p350, %s38, 0
        %s352 = sadd.s32 %s351, %s349
        %s353 = smul.addr %s352, 8
        %s354 = scalar_lea.vmem %s1, %s353
        %p355 = scmp.lt.s32.totalorder %s37, 1
        %s356 = scalar_select %p355, %s37, 1
        %p357 = scmp.lt.s32.totalorder %s39, 0
        %s358 = scalar_select %p357, %s39, 0
        %s359 = sadd.s32 %s358, %s356
        %s360 = smul.addr %s359, 8
        %s361 = scalar_lea.vmem %s2, %s360
        %s362 = smul.u32 16, %s39
        %p363 = scmp.eq.s32.totalorder %s39, 0
        // Predicated region
        $region49: #{tpu_custom_call.1} parent=43 // pred_check
          %p364 = pneg %p363
        $region50: #{tpu_custom_call.1} parent=43 // pred_check_branch
          %366 = sbr.rel (%p364) target = $region52
        $region51: #{tpu_custom_call.1} parent=43 // pred_region
          %v367 = vld [vmem:[%s354] sm:$0xff]
          %v368 = vld [vmem:[%s4] sm:$0xff]
          %v369 = vld [vmem:[%s4 + $0x8] sm:$0xff]
          %v370 = vld [vmem:[%s4 + $0x10] sm:$0xff]
          %v371 = vld [vmem:[%s4 + $0x18] sm:$0xff]
          %v372 = vld [vmem:[%s4 + $0x20] sm:$0xff]
          %v373 = vld [vmem:[%s4 + $0x28] sm:$0xff]
          %v374 = vld [vmem:[%s4 + $0x30] sm:$0xff]
          %v375 = vld [vmem:[%s4 + $0x38] sm:$0xff]
          %v376 = vld [vmem:[%s4 + $0x40] sm:$0xff]
          %v377 = vld [vmem:[%s4 + $0x48] sm:$0xff]
          %v378 = vld [vmem:[%s4 + $0x50] sm:$0xff]
          %v379 = vld [vmem:[%s4 + $0x58] sm:$0xff]
          %v380 = vld [vmem:[%s4 + $0x60] sm:$0xff]
          %v381 = vld [vmem:[%s4 + $0x68] sm:$0xff]
          %v382 = vld [vmem:[%s4 + $0x70] sm:$0xff]
          %v383 = vld [vmem:[%s4 + $0x78] sm:$0xff]
          %384 = vmatpush.msra.mxu0 %v383
          %385 = vmatpush.msra.mxu0 %v382
          %386 = vmatpush.msra.mxu0 %v381
          %387 = vmatpush.msra.mxu0 %v380
          %388 = vmatpush.msra.mxu0 %v379
          %389 = vmatpush.msra.mxu0 %v378
          %390 = vmatpush.msra.mxu0 %v377
          %391 = vmatpush.msra.mxu0 %v376
          %392 = vmatpush.msra.mxu0 %v375
          %393 = vmatpush.msra.mxu0 %v374
          %394 = vmatpush.msra.mxu0 %v373
          %395 = vmatpush.msra.mxu0 %v372
          %396 = vmatpush.msra.mxu0 %v371
          %397 = vmatpush.msra.mxu0 %v370
          %398 = vmatpush.msra.mxu0 %v369
          %399 = vmatpush.msra.mxu0 %v368
          %400 = vmatmul.f32.gmra.mxu0 %v367
          %v401 = vpop.f32.mrf.mxu0
          %v402 = vadd.f32 0.0, %v401
          %403 = vdwg.mxu0
          %vm404 = vcmask 64512
          %405 = vst.msk [vmem:[#allocation2] sm:$0xff] %vm404, %v402
          %vm406 = vcmask 7168
          %407 = vst.msk [vmem:[#allocation3] sm:$0xff] %vm406, -1e+30
          %408 = vst.msk [vmem:[#allocation4] sm:$0xff] %vm406, 0.0
          %409 = vst [vmem:[#allocation5] sm:$0xff] 0.0
        $region52: #{tpu_custom_call.1} parent=43 // pred_fallthru
          _
        %v410 = vld [vmem:[%s5] sm:$0xff]
        %v411 = vld [vmem:[%s361] sm:$0xff]
        %vm412 = vcmask 64512
        %v414 = vsel %vm412, %v410, 0
        %416 = vmatpush.msra.mxu0 0.0
        %417 = vmatpush.msra.mxu0 0.0
        %418 = vmatpush.msra.mxu0 0.0
        %419 = vmatpush.msra.mxu0 0.0
        %420 = vmatpush.msra.mxu0 0.0
        %421 = vmatpush.msra.mxu0 0.0
        %422 = vmatpush.msra.mxu0 0.0
        %423 = vmatpush.msra.mxu0 0.0
        %424 = vmatpush.msra.mxu0 0.0
        %425 = vmatpush.msra.mxu0 0.0
        %426 = vmatpush.msra.mxu0 0.0
        %427 = vmatpush.msra.mxu0 0.0
        %428 = vmatpush.msra.mxu0 0.0
        %429 = vmatpush.msra.mxu0 0.0
        %430 = vmatpush.msra.mxu0 0.0
        %431 = vmatpush.msra.mxu0 %v411
        %432 = vmatmul.f32.gmra.mxu0 %v414
        %v433 = vpop.f32.mrf.mxu0
        %v434 = vadd.f32 0.0, %v433
        %435 = vdwg.mxu0
        %v436 = vld [vmem:[#allocation2] sm:$0xff]
        %v437 = vld [vmem:[%s6] sm:$0x1]
        %439 = vset.pattern.permute.xlu0 0
        %440 = vperm.xlu0 %439, %v436
        %v441 = vpop.permute.xlu0 %440
        %v443 = vperm.slane %v434, 0
        %v444 = vadd.f32 %v441, %v443
        %v445 = vtanh.pop %v444
        %v447 = vperm.slane %v437, 0
        %448 = vset.pattern.permute.xlu0 0
        %449 = vperm.xlu0 %448, %v447
        %v450 = vpop.permute.xlu0 %449
        %v452 = vmul.f32 %v450, %v445
        %v453 = vadd.f32 %v452, 0.0
        %454 = vset.pattern.permute.xlu0 1
        %455 = vperm.xlu0 %454, %v436
        %v456 = vpop.permute.xlu0 %455
        %v458 = vperm.slane %v434, 1
        %v459 = vadd.f32 %v456, %v458
        %v460 = vtanh.pop %v459
        %461 = vset.pattern.permute.xlu0 1
        %462 = vperm.xlu0 %461, %v447
        %v463 = vpop.permute.xlu0 %462
        %v465 = vmul.f32 %v463, %v460
        %v466 = vadd.f32 %v453, %v465
        %467 = vset.pattern.permute.xlu0 2
        %468 = vperm.xlu0 %467, %v436
        %v469 = vpop.permute.xlu0 %468
        %v471 = vperm.slane %v434, 2
        %v472 = vadd.f32 %v469, %v471
        %v473 = vtanh.pop %v472
        %474 = vset.pattern.permute.xlu0 2
        %475 = vperm.xlu0 %474, %v447
        %v476 = vpop.permute.xlu0 %475
        %v478 = vmul.f32 %v476, %v473
        %v479 = vadd.f32 %v466, %v478
        %480 = vset.pattern.permute.xlu0 3
        %481 = vperm.xlu0 %480, %v436
        %v482 = vpop.permute.xlu0 %481
        %v484 = vperm.slane %v434, 3
        %v485 = vadd.f32 %v482, %v484
        %v486 = vtanh.pop %v485
        %487 = vset.pattern.permute.xlu0 3
        %488 = vperm.xlu0 %487, %v447
        %v489 = vpop.permute.xlu0 %488
        %v491 = vmul.f32 %v489, %v486
        %v492 = vadd.f32 %v479, %v491
        %493 = vset.pattern.permute.xlu0 4
        %494 = vperm.xlu0 %493, %v436
        %v495 = vpop.permute.xlu0 %494
        %v497 = vperm.slane %v434, 4
        %v498 = vadd.f32 %v495, %v497
        %v499 = vtanh.pop %v498
        %500 = vset.pattern.permute.xlu0 4
        %501 = vperm.xlu0 %500, %v447
        %v502 = vpop.permute.xlu0 %501
        %v504 = vmul.f32 %v502, %v499
        %v505 = vadd.f32 %v492, %v504
        %506 = vset.pattern.permute.xlu0 5
        %507 = vperm.xlu0 %506, %v436
        %v508 = vpop.permute.xlu0 %507
        %v510 = vperm.slane %v434, 5
        %v511 = vadd.f32 %v508, %v510
        %v512 = vtanh.pop %v511
        %513 = vset.pattern.permute.xlu0 5
        %514 = vperm.xlu0 %513, %v447
        %v515 = vpop.permute.xlu0 %514
        %v517 = vmul.f32 %v515, %v512
        %v518 = vadd.f32 %v505, %v517
        %519 = vset.pattern.permute.xlu0 6
        %520 = vperm.xlu0 %519, %v436
        %v521 = vpop.permute.xlu0 %520
        %v523 = vperm.slane %v434, 6
        %v524 = vadd.f32 %v521, %v523
        %v525 = vtanh.pop %v524
        %526 = vset.pattern.permute.xlu0 6
        %527 = vperm.xlu0 %526, %v447
        %v528 = vpop.permute.xlu0 %527
        %v530 = vmul.f32 %v528, %v525
        %v531 = vadd.f32 %v518, %v530
        %532 = vset.pattern.permute.xlu0 7
        %533 = vperm.xlu0 %532, %v436
        %v534 = vpop.permute.xlu0 %533
        %v536 = vperm.slane %v434, 7
        %v537 = vadd.f32 %v534, %v536
        %v538 = vtanh.pop %v537
        %539 = vset.pattern.permute.xlu0 7
        %540 = vperm.xlu0 %539, %v447
        %v541 = vpop.permute.xlu0 %540
        %v543 = vmul.f32 %v541, %v538
        %v544 = vadd.f32 %v531, %v543
        %v545 = vlaneseq
        %v546 = vand.u32 %v545, 127
        %s547 = smul.u32 %s39, 128
        %v548 = vstv %s547
        %v549 = vadd.s32 %v546, %v548
        %s550 = sld [smem:[#allocation7 + %s37]]
        %v551 = vstv %s550
        %vm552 = vcmp.lt.s32.totalorder %v549, %v551
        %v553 = vsel %vm552, %v544, -1000000.0
        %v554 = vld [vmem:[#allocation3] sm:$0xff]
        %555 = vmax.xlane.f32.xlu0 %v553
        %v556 = vpop.xlane.xlu0 %555
        %v557 = vmax.f32 %v554, %v556
        %v558 = vsub.f32 %v554, %v557
        %v559 = vmul.f32 %v558, 1.442695
        %v560 = vpow.pop %v559
        %562 = vset.pattern.permute.xlu0 0
        %563 = vperm.xlu0 %562, %v557
        %v564 = vpop.permute.xlu0 %563
        %v566 = vsub.f32 %v553, %v564
        %v567 = vmul.f32 %v566, 1.442695
        %v568 = vpow.pop %v567
        %vm569 = vcmp.lt.s32.totalorder %v549, 10
        %v570 = vsel %vm569, %v568, 0.0
        %v571 = vld [vmem:[#allocation4] sm:$0xff]
        %v572 = vmul.f32 %v560, %v571
        %573 = vadd.xlane.f32.xlu0 %v570
        %v574 = vpop.xlane.xlu0 %573
        %v575 = vadd.f32 %v572, %v574
        %vm576 = vcmask 7168
        %577 = vst.msk [vmem:[#allocation4] sm:$0xff] %vm576, %v575
        %v578 = vld [vmem:[#allocation5] sm:$0xff]
        %580 = vset.pattern.permute.xlu0 0
        %581 = vperm.xlu0 %580, %v560
        %v582 = vpop.permute.xlu0 %581
        %v584 = vmul.f32 %v582, %v578
        %v585 = vld [vmem:[%s304] sm:$0xff]
        %v586 = vld [vmem:[%s304 + $0x8] sm:$0xff]
        %v587 = vld [vmem:[%s304 + $0x10] sm:$0xff]
        %v588 = vld [vmem:[%s304 + $0x18] sm:$0xff]
        %v589 = vld [vmem:[%s304 + $0x20] sm:$0xff]
        %v590 = vld [vmem:[%s304 + $0x28] sm:$0xff]
        %v591 = vld [vmem:[%s304 + $0x30] sm:$0xff]
        %v592 = vld [vmem:[%s304 + $0x38] sm:$0xff]
        %v593 = vld [vmem:[%s304 + $0x40] sm:$0xff]
        %v594 = vld [vmem:[%s304 + $0x48] sm:$0xff]
        %v595 = vld [vmem:[%s304 + $0x50] sm:$0xff]
        %v596 = vld [vmem:[%s304 + $0x58] sm:$0xff]
        %v597 = vld [vmem:[%s304 + $0x60] sm:$0xff]
        %v598 = vld [vmem:[%s304 + $0x68] sm:$0xff]
        %v599 = vld [vmem:[%s304 + $0x70] sm:$0xff]
        %v600 = vld [vmem:[%s304 + $0x78] sm:$0xff]
        %601 = vmatpush.msra.mxu0 %v600
        %602 = vmatpush.msra.mxu0 %v599
        %603 = vmatpush.msra.mxu0 %v598
        %604 = vmatpush.msra.mxu0 %v597
        %605 = vmatpush.msra.mxu0 %v596
        %606 = vmatpush.msra.mxu0 %v595
        %607 = vmatpush.msra.mxu0 %v594
        %608 = vmatpush.msra.mxu0 %v593
        %609 = vmatpush.msra.mxu0 %v592
        %610 = vmatpush.msra.mxu0 %v591
        %611 = vmatpush.msra.mxu0 %v590
        %612 = vmatpush.msra.mxu0 %v589
        %613 = vmatpush.msra.mxu0 %v588
        %614 = vmatpush.msra.mxu0 %v587
        %615 = vmatpush.msra.mxu0 %v586
        %616 = vmatpush.msra.mxu0 %v585
        %617 = vmatmul.f32.gmra.mxu0 %v570
        %v618 = vpop.f32.mrf.mxu0
        %v619 = vadd.f32 0.0, %v618
        %620 = vdwg.mxu0
        %v621 = vadd.f32 %v584, %v619
        %622 = vst [vmem:[#allocation5] sm:$0xff] %v621
        %623 = vst.msk [vmem:[#allocation3] sm:$0xff] %vm576, %v557
        // Predicated region
        $region53: #{tpu_custom_call.1} parent=43 // pred_check
          %p624 = pneg %p363
        $region54: #{tpu_custom_call.1} parent=43 // pred_check_branch
          %626 = sbr.rel (%p624) target = $region56
        $region55: #{tpu_custom_call.1} parent=43 // pred_region
          %v627 = vld [vmem:[#allocation4] sm:$0xff]
          %v628 = vrcp.pop %v627
          %v629 = vld [vmem:[#allocation5] sm:$0xff]
          %631 = vset.pattern.permute.xlu0 0
          %632 = vperm.xlu0 %631, %v628
          %v633 = vpop.permute.xlu0 %632
          %v635 = vmul.f32 %v629, %v633
          %636 = vst [vmem:[%s347] sm:$0xff] %v635
        $region56: #{tpu_custom_call.1} parent=43 // pred_fallthru
          _
        %s637 = sand.u32 %s208, 1
        %s638 = scalar_lea.sflag [#allocation10], %s637
        %s639 = sand.u32 %s208, 1
        %s640 = smul.addr %s639, 8
        %s641 = scalar_lea.vmem [#allocation11], %s640
        // Predicated region
        $region57: #{tpu_custom_call.1} parent=43 // pred_check
          %p642 = pneg %p218
        $region58: #{tpu_custom_call.1} parent=43 // pred_check_branch
          %644 = sbr.rel (%p642) target = $region60
        $region59: #{tpu_custom_call.1} parent=43 // pred_region
          %646 = vsyncadd %s638, 0
          %s647 = sadd.s32 %s38, %s37
          %s648 = smul.addr %s647, 8
          %s649 = scalar_lea.hbm %s7, %s648
          %s651 = sshll.u32 %s641, 4
          %s652 = int_to_ptr.vmem [resolvable:$true] %s651
          %s653 = sshll.u32 %s649, 4
          %s654 = int_to_ptr.hbm [resolvable:$true] %s653
          %656 = dma.vmem_to_hbm [thread:$0]  %s652, 128, %s654, %s638
        $region60: #{tpu_custom_call.1} parent=43 // pred_fallthru
          _
      $region44: #{tpu_custom_call.1} parent=5 // pred_fallthru
        _
      %p657 = scmp.le.s32.totalorder 2, %s27
      // Predicated region
      $region61: #{tpu_custom_call.1} parent=5 // pred_check
        %p658 = pneg %p657
      $region62: #{tpu_custom_call.1} parent=5 // pred_check_branch
        %660 = sbr.rel (%p658) target = $region64
      $region63: #{tpu_custom_call.1} parent=5 // pred_region
        %s661 = ssub.s32 %s27, 2
        // Predicated region
        $region65: #{tpu_custom_call.1} parent=63 // pred_check
          %p662 = pneg %p224
        $region66: #{tpu_custom_call.1} parent=63 // pred_check_branch
          %664 = sbr.rel (%p662) target = $region68
        $region67: #{tpu_custom_call.1} parent=63 // pred_region
          %s665 = sand.u32 %s209, 1
          %s666 = scalar_lea.sflag [#allocation10], %s665
          %s667 = sand.u32 %s209, 1
          %s668 = smul.addr %s667, 8
          %s669 = scalar_lea.vmem [#allocation11], %s668
          %671 = dma.done %s666, 128
        $region68: #{tpu_custom_call.1} parent=63 // pred_fallthru
          _
      $region64: #{tpu_custom_call.1} parent=5 // pred_fallthru
        _
    $region6: #{tpu_custom_call.1} parent=1 // loop_footer
      %s31 = sadd.s32 1, %s27
    $region7: #{tpu_custom_call.1} parent=1 // loop_footer_branch
      %26 = sbr.rel target = $region3
    $region8: #{tpu_custom_call.1} parent=1 // loop_exit
      _
    %672 = vsyncpa [#allocation9], 1
    %s673 = scalar_lea.sflag [#allocation9], 1
    %674 = vsyncpa %s673, 1
    %675 = vsyncpa [#allocation10], 1
    %s676 = scalar_lea.sflag [#allocation10], 1
    %677 = vsyncpa %s676, 1

</llo_original>
